<compile_context>
chip_gen: v7x
topology: tpu7x:2x2x1
jax: 0.10.0
libtpu: 0.0.40
codegen_flags: <defaults>
</compile_context>

<pallas_src>
import jax
import jax.numpy as jnp
from jax.experimental import pallas as pl
from jax.experimental.pallas import tpu as pltpu


def mlp_kernel(xT_ref, w1_ref, b1_ref, w2_ref, b2_ref, oT_ref):
    # fc1: (H, S) @ (S, TB) -> (H, TB), f32 accumulation on the MXU.
    h = jnp.dot(w1_ref[...], xT_ref[...], preferred_element_type=jnp.float32)
    h = h + b1_ref[...]                       # (H, TB) + (H, 1) lane-broadcast
    h = jnp.maximum(h, 0.0)                   # ReLU (f32 epilogue, VPU filler)
    # fc2: (A, H) @ (H, TB) -> (A, TB); cast h to the weight dtype so the
    # bf16 path hits the bf16-native MXU while accumulation stays f32.
    out = jnp.dot(w2_ref[...], h.astype(w2_ref.dtype),
                  preferred_element_type=jnp.float32)
    out = out + b2_ref[...]                   # (A, TB) + (A, 1)
    oT_ref[...] = out.astype(oT_ref.dtype)    # lane-dense store: full 128 lanes


def small_forward(state, w1, b1, w2, b2, *, block_b=2048,
                  compute_dtype=None, core_parallel=False):
    """Forward pass of `Small`.

    state: (B, S) f32
    w1: (64, S), b1: (64,)   -- PyTorch nn.Linear layout (out_features, in_features)
    w2: (A, 64), b2: (A,)
    returns (B, A) in state.dtype.
    """
    B, S = state.shape
    H, _ = w1.shape
    A, _ = w2.shape
    out_dtype = state.dtype

    # One-time wrapper-side transpose -> feature-major so the batch sits on
    # the 128-lane axis for both loads and stores inside the kernel.
    xT = jnp.transpose(state)                                  # (S, B)
    if compute_dtype is not None:
        xT = xT.astype(compute_dtype)
        w1 = w1.astype(compute_dtype)
        w2 = w2.astype(compute_dtype)
    # Biases stay f32 (f32 accumulation/epilogue) and are shaped (N, 1) so
    # they broadcast along lanes inside the kernel.
    b1_col = b1.astype(jnp.float32).reshape(H, 1)
    b2_col = b2.astype(jnp.float32).reshape(A, 1)

    in_itemsize = jnp.dtype(xT.dtype).itemsize
    cost = pl.CostEstimate(
        flops=2 * B * (S * H + H * A),
        transcendentals=0,
        bytes_accessed=((xT.size + w1.size + w2.size) * in_itemsize
                        + (b1.size + b2.size + B * A) * 4),
    )

    if B <= block_b:
        # Gridless path: single invocation, everything VMEM-resident, no
        # pipelining machinery.  (For B <= ~128 an XLA-fused HLO is at parity;
        # the Pallas path is kept so this composes with larger Pallas work.)
        outT = pl.pallas_call(
            mlp_kernel,
            out_shape=jax.ShapeDtypeStruct((A, B), out_dtype),
            in_specs=[pl.BlockSpec(memory_space=pltpu.MemorySpace.VMEM)] * 5,
            out_specs=pl.BlockSpec(memory_space=pltpu.MemorySpace.VMEM),
            cost_estimate=cost,
        )(xT, w1, b1_col, w2, b2_col)
        return jnp.transpose(outT)

    # Batch-tiled path: stream only the batch (lane) axis in large tiles.
    # All block last-dims are either block_b (multiple of 128) or the full
    # array dim -> the (8, 128) rule is satisfied.  A ragged final tile is
    # safe because batch columns are independent.
    grid = (pl.cdiv(B, block_b),)
    batch_sem = pltpu.CORE_PARALLEL if core_parallel else pltpu.PARALLEL
    outT = pl.pallas_call(
        mlp_kernel,
        out_shape=jax.ShapeDtypeStruct((A, B), out_dtype),
        grid_spec=pltpu.PrefetchScalarGridSpec(
            num_scalar_prefetch=0,
            grid=grid,
            in_specs=[
                pl.BlockSpec((S, block_b), lambda i: (0, i)),  # x^T tile
                pl.BlockSpec((H, S), lambda i: (0, 0)),        # w1 resident
                pl.BlockSpec((H, 1), lambda i: (0, 0)),        # b1 resident
                pl.BlockSpec((A, H), lambda i: (0, 0)),        # w2 resident
                pl.BlockSpec((A, 1), lambda i: (0, 0)),        # b2 resident
            ],
            out_specs=pl.BlockSpec((A, block_b), lambda i: (0, i)),
        ),
        compiler_params=pltpu.CompilerParams(
            dimension_semantics=(batch_sem,)),
        cost_estimate=cost,
    )(xT, w1, b1_col, w2, b2_col)
    return jnp.transpose(outT)


def init_params(key, state_size, hidden, action_size):
    # Deterministic init mimicking PyTorch nn.Linear default:
    # U(-1/sqrt(fan_in), 1/sqrt(fan_in)); weights in (out, in) layout.
    k1, k2, k3, k4 = jax.random.split(key, 4)
    lim1 = 1.0 / (state_size ** 0.5)
    lim2 = 1.0 / (hidden ** 0.5)
    w1 = jax.random.uniform(k1, (hidden, state_size), jnp.float32, -lim1, lim1)
    b1 = jax.random.uniform(k2, (hidden,), jnp.float32, -lim1, lim1)
    w2 = jax.random.uniform(k3, (action_size, hidden), jnp.float32, -lim2, lim2)
    b2 = jax.random.uniform(k4, (action_size,), jnp.float32, -lim2, lim2)
    return w1, b1, w2, b2


def _reference(x, w1, b1, w2, b2):
    return jnp.maximum(x @ w1.T + b1, 0.0) @ w2.T + b2


if __name__ == "__main__":
    key = jax.random.PRNGKey(0)
    k_x, k_xl, k_p = jax.random.split(key, 3)

    state_size, hidden, action_size = 32, 64, 8
    w1, b1, w2, b2 = init_params(k_p, state_size, hidden, action_size)

    # --- small-batch (gridless, VMEM-resident) path, f32 ---
    batch_small = 8
    x_small = jax.random.normal(k_x, (batch_small, state_size), jnp.float32)
    out_small = small_forward(x_small, w1, b1, w2, b2)
    jax.block_until_ready(out_small)
    ref_small = _reference(x_small, w1, b1, w2, b2)
    assert out_small.shape == (batch_small, action_size)
    assert jnp.allclose(out_small, ref_small, atol=1e-5, rtol=1e-5)

    # --- large-batch (batch-tiled, lane-dense, resident-weights) path, f32 ---
    batch_large = 4096
    x_large = jax.random.normal(k_xl, (batch_large, state_size), jnp.float32)
    out_large = small_forward(x_large, w1, b1, w2, b2, block_b=1024)
    jax.block_until_ready(out_large)
    ref_large = _reference(x_large, w1, b1, w2, b2)
    assert out_large.shape == (batch_large, action_size)
    assert jnp.allclose(out_large, ref_large, atol=1e-4, rtol=1e-5)

    # --- bf16 matmul inputs, f32 accumulation/epilogue (v6e/v7x path) ---
    out_bf16 = small_forward(x_large, w1, b1, w2, b2, block_b=1024,
                             compute_dtype=jnp.bfloat16)
    jax.block_until_ready(out_bf16)
    assert out_bf16.shape == (batch_large, action_size)
    assert jnp.allclose(out_bf16, ref_large, atol=5e-2, rtol=5e-2)

    print("KERNEL_OK")
</pallas_src>

<mosaic_0001>
module attributes {stable_mosaic.version = 11 : i64} {
  func.func @mlp_kernel(%arg0: memref<32x8xf32, #tpu.memory_space<vmem>>, %arg1: memref<64x32xf32, #tpu.memory_space<vmem>>, %arg2: memref<64x1xf32, #tpu.memory_space<vmem>>, %arg3: memref<8x64xf32, #tpu.memory_space<vmem>>, %arg4: memref<8x1xf32, #tpu.memory_space<vmem>>, %arg5: memref<8x8xf32, #tpu.memory_space<vmem>>) attributes {dimension_semantics = [], scalar_prefetch = 0 : i64, scratch_operands = 0 : i64, tpu.core_type = #tpu.core_type<tc>} {
    %c0 = arith.constant 0 : index
    %c0_0 = arith.constant 0 : index
    %0 = vector.load %arg1[%c0, %c0_0] : memref<64x32xf32, #tpu.memory_space<vmem>>, vector<64x32xf32>
    %c0_1 = arith.constant 0 : index
    %c0_2 = arith.constant 0 : index
    %1 = vector.load %arg0[%c0_1, %c0_2] : memref<32x8xf32, #tpu.memory_space<vmem>>, vector<32x8xf32>
    %cst = arith.constant dense<0.000000e+00> : vector<64x8xf32>
    %2 = tpu.matmul %0, %1, %cst {dimension_numbers = #tpu.dot_dimension_numbers<[1], [0], [0], [1], [0, 0, 1, 1], [], []>} : vector<64x32xf32>, vector<32x8xf32>, vector<64x8xf32> -> vector<64x8xf32>
    %c0_3 = arith.constant 0 : index
    %c0_4 = arith.constant 0 : index
    %3 = vector.load %arg2[%c0_3, %c0_4] : memref<64x1xf32, #tpu.memory_space<vmem>>, vector<64x1xf32>
    %4 = vector.broadcast %3 : vector<64x1xf32> to vector<64x8xf32>
    %5 = arith.addf %2, %4 : vector<64x8xf32>
    %cst_5 = arith.constant 0.000000e+00 : f32
    %6 = vector.broadcast %cst_5 : f32 to vector<64x8xf32>
    %7 = arith.maximumf %5, %6 : vector<64x8xf32>
    %c0_6 = arith.constant 0 : index
    %c0_7 = arith.constant 0 : index
    %8 = vector.load %arg3[%c0_6, %c0_7] : memref<8x64xf32, #tpu.memory_space<vmem>>, vector<8x64xf32>
    %cst_8 = arith.constant dense<0.000000e+00> : vector<8x8xf32>
    %9 = tpu.matmul %8, %7, %cst_8 {dimension_numbers = #tpu.dot_dimension_numbers<[1], [0], [0], [1], [0, 0, 1, 1], [], []>} : vector<8x64xf32>, vector<64x8xf32>, vector<8x8xf32> -> vector<8x8xf32>
    %c0_9 = arith.constant 0 : index
    %c0_10 = arith.constant 0 : index
    %10 = vector.load %arg4[%c0_9, %c0_10] : memref<8x1xf32, #tpu.memory_space<vmem>>, vector<8x1xf32>
    %11 = vector.broadcast %10 : vector<8x1xf32> to vector<8x8xf32>
    %12 = arith.addf %9, %11 : vector<8x8xf32>
    %c0_11 = arith.constant 0 : index
    %c0_12 = arith.constant 0 : index
    %13 = vector.load %arg5[%c0_11, %c0_12] : memref<8x8xf32, #tpu.memory_space<vmem>>, vector<8x8xf32>
    tpu.vector_store %arg5[%c0_11, %c0_12], %12 {strides = array<i32>} : memref<8x8xf32, #tpu.memory_space<vmem>>, vector<8x8xf32>,
    return
  }
}

</mosaic_0001>

<llo_original>
// kernel: tpu_custom_call.1
$region0: #{tpu_custom_call.1}
  #allocation0 [shape = 'u32[]', space=smem, size = 0x4, offset = 0x4, fixed_abs, tag = 'smem constant byte address 0x4 - core index']
  #allocation1 [shape = 'u32[144,128]{1,0:T(1,128)}', space=vmem, size = 0x12000, scoped, tag = 'internal scratch']
  %s0 = inlined_call_operand.vmem [shape: f32[32,8], index: 0, kind: input, shape index: {}]
  %s1 = inlined_call_operand.vmem [shape: f32[64,32], index: 1, kind: input, shape index: {}]
  %s2 = inlined_call_operand.vmem [shape: f32[64,1], index: 2, kind: input, shape index: {}]
  %s3 = inlined_call_operand.vmem [shape: f32[8,64], index: 3, kind: input, shape index: {}]
  %s4 = inlined_call_operand.vmem [shape: f32[8,1], index: 4, kind: input, shape index: {}]
  %s5 = inlined_call_operand.hbm [shape: f32[8,8], index: 5, kind: output, shape index: {}]
  %s6 = sld [smem:[#allocation0]]
  $region30: #{tpu_custom_call.1} parent=0
    _
  %s8 = ssub.s32 1, %s6
  %s9 = scalar_select 0, %s8, %s6
  $region1: #{tpu_custom_call.1} parent=0
    #allocation2 [shape = 'u8[4096]{0}', space=vmem, size = 0x1000, scoped, tag = 'output window, operand 0, single buffered']
    #allocation3 [shape = 's32[1]{0}', space=sflag, size = 0x4, scoped, tag = 'scoped memory for tpu_custom_call.1']
    %10 = vsyncpa [#allocation3], 0
    // Predicated region
    $region2: #{tpu_custom_call.1} parent=1 // pred_check
      _
    $region3: #{tpu_custom_call.1} parent=1 // pred_check_branch
      %12 = sbr.rel (0) target = $region5
    $region4: #{tpu_custom_call.1} parent=1 // pred_region
      _
    $region5: #{tpu_custom_call.1} parent=1 // pred_fallthru
      _
    // Predicated region
    $region6: #{tpu_custom_call.1} parent=1 // pred_check
      _
    $region7: #{tpu_custom_call.1} parent=1 // pred_check_branch
      %14 = sbr.rel (0) target = $region9
    $region8: #{tpu_custom_call.1} parent=1 // pred_region
      _
    $region9: #{tpu_custom_call.1} parent=1 // pred_fallthru
      _
    // Predicated region
    $region10: #{tpu_custom_call.1} parent=1 // pred_check
      _
    $region11: #{tpu_custom_call.1} parent=1 // pred_check_branch
      %16 = sbr.rel (0) target = $region13
    $region12: #{tpu_custom_call.1} parent=1 // pred_region
      _
    $region13: #{tpu_custom_call.1} parent=1 // pred_fallthru
      _
    // Predicated region
    $region14: #{tpu_custom_call.1} parent=1 // pred_check
      _
    $region15: #{tpu_custom_call.1} parent=1 // pred_check_branch
      %18 = sbr.rel (0) target = $region17
    $region16: #{tpu_custom_call.1} parent=1 // pred_region
      _
    $region17: #{tpu_custom_call.1} parent=1 // pred_fallthru
      _
    // Predicated region
    $region18: #{tpu_custom_call.1} parent=1 // pred_check
      _
    $region19: #{tpu_custom_call.1} parent=1 // pred_check_branch
      %20 = sbr.rel (0) target = $region21
    $region20: #{tpu_custom_call.1} parent=1 // pred_region
      _
    $region21: #{tpu_custom_call.1} parent=1 // pred_fallthru
      _
    %v21 = vld [vmem:[%s1] sm:$0xff]
    %v22 = vld [vmem:[%s1 + $0x8] sm:$0xff]
    %v23 = vld [vmem:[%s1 + $0x10] sm:$0xff]
    %v24 = vld [vmem:[%s1 + $0x18] sm:$0xff]
    %v25 = vld [vmem:[%s1 + $0x20] sm:$0xff]
    %v26 = vld [vmem:[%s1 + $0x28] sm:$0xff]
    %v27 = vld [vmem:[%s1 + $0x30] sm:$0xff]
    %v28 = vld [vmem:[%s1 + $0x38] sm:$0xff]
    %v29 = vld [vmem:[%s0] sm:$0xff]
    %v30 = vld [vmem:[%s0 + $0x8] sm:$0xff]
    %v31 = vld [vmem:[%s0 + $0x10] sm:$0xff]
    %v32 = vld [vmem:[%s0 + $0x18] sm:$0xff]
    %v33 = vld [vmem:[%s2] sm:$0xff]
    %v34 = vld [vmem:[%s2 + $0x8] sm:$0xff]
    %v35 = vld [vmem:[%s2 + $0x10] sm:$0xff]
    %v36 = vld [vmem:[%s2 + $0x18] sm:$0xff]
    %v37 = vld [vmem:[%s2 + $0x20] sm:$0xff]
    %v38 = vld [vmem:[%s2 + $0x28] sm:$0xff]
    %v39 = vld [vmem:[%s2 + $0x30] sm:$0xff]
    %v40 = vld [vmem:[%s2 + $0x38] sm:$0xff]
    %42 = vset.pattern.permute.xlu0 0
    %43 = vperm.xlu0 %42, %v33
    %v44 = vpop.permute.xlu0 %43
    %47 = vset.pattern.permute.xlu0 0
    %48 = vperm.xlu0 %47, %v34
    %v49 = vpop.permute.xlu0 %48
    %52 = vset.pattern.permute.xlu0 0
    %53 = vperm.xlu0 %52, %v35
    %v54 = vpop.permute.xlu0 %53
    %57 = vset.pattern.permute.xlu0 0
    %58 = vperm.xlu0 %57, %v36
    %v59 = vpop.permute.xlu0 %58
    %62 = vset.pattern.permute.xlu0 0
    %63 = vperm.xlu0 %62, %v37
    %v64 = vpop.permute.xlu0 %63
    %67 = vset.pattern.permute.xlu0 0
    %68 = vperm.xlu0 %67, %v38
    %v69 = vpop.permute.xlu0 %68
    %72 = vset.pattern.permute.xlu0 0
    %73 = vperm.xlu0 %72, %v39
    %v74 = vpop.permute.xlu0 %73
    %77 = vset.pattern.permute.xlu0 0
    %78 = vperm.xlu0 %77, %v40
    %v79 = vpop.permute.xlu0 %78
    %vm81 = vcmask 261120
    %v83 = vsel %vm81, %v21, 0
    %v86 = vsel %vm81, %v22, 0
    %v89 = vsel %vm81, %v23, 0
    %v92 = vsel %vm81, %v24, 0
    %v95 = vsel %vm81, %v25, 0
    %v98 = vsel %vm81, %v26, 0
    %v101 = vsel %vm81, %v27, 0
    %v104 = vsel %vm81, %v28, 0
    %106 = vmatprep.subr.mxu0 0.0
    %107 = vmatpush1.msra.mxu0 %v29
    %108 = vmatprep.subr.mxu0 0.0
    %109 = vmatpush1.msra.mxu0 %v30
    %110 = vmatprep.subr.mxu0 0.0
    %111 = vmatpush1.msra.mxu0 %v31
    %112 = vmatprep.subr.mxu0 0.0
    %113 = vmatpush1.msra.mxu0 %v32
    %114 = vmatprep.subr.mxu0 0.0
    %115 = vmatpush1.msra.mxu0 0.0
    %116 = vmatprep.subr.mxu0 0.0
    %117 = vmatpush1.msra.mxu0 0.0
    %118 = vmatprep.subr.mxu0 0.0
    %119 = vmatpush1.msra.mxu0 0.0
    %120 = vmatprep.subr.mxu0 0.0
    %121 = vmatpush1.msra.mxu0 0.0
    %122 = vmatprep.subr.mxu0 0.0
    %123 = vmatpush1.msra.mxu0 0.0
    %124 = vmatprep.subr.mxu0 0.0
    %125 = vmatpush1.msra.mxu0 0.0
    %126 = vmatprep.subr.mxu0 0.0
    %127 = vmatpush1.msra.mxu0 0.0
    %128 = vmatprep.subr.mxu0 0.0
    %129 = vmatpush1.msra.mxu0 0.0
    %130 = vmatprep.subr.mxu0 0.0
    %131 = vmatpush1.msra.mxu0 0.0
    %132 = vmatprep.subr.mxu0 0.0
    %133 = vmatpush1.msra.mxu0 0.0
    %134 = vmatprep.subr.mxu0 0.0
    %135 = vmatpush1.msra.mxu0 0.0
    %136 = vmatprep.subr.mxu0 0.0
    %137 = vmatpush1.msra.mxu0 0.0
    %138 = vmatprep.subr.mxu0 0.0
    %139 = vmatpush1.msra.mxu0 0.0
    %140 = vmatprep.subr.mxu0 0.0
    %141 = vmatpush1.msra.mxu0 0.0
    %142 = vmatprep.subr.mxu0 0.0
    %143 = vmatpush1.msra.mxu0 0.0
    %144 = vmatprep.subr.mxu0 0.0
    %145 = vmatpush1.msra.mxu0 0.0
    %146 = vmatprep.subr.mxu0 0.0
    %147 = vmatpush1.msra.mxu0 0.0
    %148 = vmatprep.subr.mxu0 0.0
    %149 = vmatpush1.msra.mxu0 0.0
    %150 = vmatprep.subr.mxu0 0.0
    %151 = vmatpush1.msra.mxu0 0.0
    %152 = vmatprep.subr.mxu0 0.0
    %153 = vmatpush1.msra.mxu0 0.0
    %154 = vmatprep.subr.mxu0 0.0
    %155 = vmatpush1.msra.mxu0 0.0
    %156 = vmatprep.subr.mxu0 0.0
    %157 = vmatpush1.msra.mxu0 0.0
    %158 = vmatprep.subr.mxu0 0.0
    %159 = vmatpush1.msra.mxu0 0.0
    %160 = vmatprep.subr.mxu0 0.0
    %161 = vmatpush1.msra.mxu0 0.0
    %162 = vmatprep.subr.mxu0 0.0
    %163 = vmatpush1.msra.mxu0 0.0
    %164 = vmatprep.subr.mxu0 0.0
    %165 = vmatpush1.msra.mxu0 0.0
    %166 = vmatprep.subr.mxu0 0.0
    %167 = vmatpush1.msra.mxu0 0.0
    %168 = vmatprep.subr.mxu0 0.0
    %169 = vmatpush1.msra.mxu0 0.0
    %170 = vmatprep.mubr.f32.mxu0 0.0
    %171 = vmatmul.mubr.f32.gmra.mrb[0].mxu0 %v83
    %v172 = vpop.f32.mrb[0].mxu0
    %v173 = vadd.f32 %v44, %v172
    %v174 = vpop.f32.mrb[0].mxu0
    %175 = vmatprep.mubr.f32.mxu0 0.0
    %176 = vmatmul.mubr.f32.gmra.mrb[0].mxu0 %v86
    %v177 = vpop.f32.mrb[0].mxu0
    %v178 = vadd.f32 %v49, %v177
    %v179 = vpop.f32.mrb[0].mxu0
    %180 = vmatprep.mubr.f32.mxu0 0.0
    %181 = vmatmul.mubr.f32.gmra.mrb[0].mxu0 %v89
    %v182 = vpop.f32.mrb[0].mxu0
    %v183 = vadd.f32 %v54, %v182
    %v184 = vpop.f32.mrb[0].mxu0
    %185 = vmatprep.mubr.f32.mxu0 0.0
    %186 = vmatmul.mubr.f32.gmra.mrb[0].mxu0 %v92
    %v187 = vpop.f32.mrb[0].mxu0
    %v188 = vadd.f32 %v59, %v187
    %v189 = vpop.f32.mrb[0].mxu0
    %190 = vmatprep.mubr.f32.mxu0 0.0
    %191 = vmatmul.mubr.f32.gmra.mrb[0].mxu0 %v95
    %v192 = vpop.f32.mrb[0].mxu0
    %v193 = vadd.f32 %v64, %v192
    %v194 = vpop.f32.mrb[0].mxu0
    %195 = vmatprep.mubr.f32.mxu0 0.0
    %196 = vmatmul.mubr.f32.gmra.mrb[0].mxu0 %v98
    %v197 = vpop.f32.mrb[0].mxu0
    %v198 = vadd.f32 %v69, %v197
    %v199 = vpop.f32.mrb[0].mxu0
    %200 = vmatprep.mubr.f32.mxu0 0.0
    %201 = vmatmul.mubr.f32.gmra.mrb[0].mxu0 %v101
    %v202 = vpop.f32.mrb[0].mxu0
    %v203 = vadd.f32 %v74, %v202
    %v204 = vpop.f32.mrb[0].mxu0
    %205 = vmatprep.mubr.f32.mxu0 0.0
    %206 = vmatmul.mubr.f32.gmra.mrb[0].mxu0 %v104
    %v207 = vpop.f32.mrb[0].mxu0
    %v208 = vadd.f32 %v79, %v207
    %v209 = vpop.f32.mrb[0].mxu0
    %210 = vdwg.mxu0
    %v211 = vmax.f32 %v173, 0.0
    %v212 = vmax.f32 %v178, 0.0
    %v213 = vmax.f32 %v183, 0.0
    %v214 = vmax.f32 %v188, 0.0
    %v215 = vmax.f32 %v193, 0.0
    %v216 = vmax.f32 %v198, 0.0
    %v217 = vmax.f32 %v203, 0.0
    %v218 = vmax.f32 %v208, 0.0
    %v219 = vld [vmem:[%s3] sm:$0xff]
    %v220 = vld [vmem:[%s4] sm:$0xff]
    %222 = vset.pattern.permute.xlu0 0
    %223 = vperm.xlu0 %222, %v220
    %v224 = vpop.permute.xlu0 %223
    %vm226 = vcmask 523264
    %v228 = vsel %vm226, %v219, 0
    %230 = vmatprep.subr.mxu0 0.0
    %231 = vmatpush1.msra.mxu0 %v211
    %232 = vmatprep.subr.mxu0 0.0
    %233 = vmatpush1.msra.mxu0 %v212
    %234 = vmatprep.subr.mxu0 0.0
    %235 = vmatpush1.msra.mxu0 %v213
    %236 = vmatprep.subr.mxu0 0.0
    %237 = vmatpush1.msra.mxu0 %v214
    %238 = vmatprep.subr.mxu0 0.0
    %239 = vmatpush1.msra.mxu0 %v215
    %240 = vmatprep.subr.mxu0 0.0
    %241 = vmatpush1.msra.mxu0 %v216
    %242 = vmatprep.subr.mxu0 0.0
    %243 = vmatpush1.msra.mxu0 %v217
    %244 = vmatprep.subr.mxu0 0.0
    %245 = vmatpush1.msra.mxu0 %v218
    %246 = vmatprep.subr.mxu0 0.0
    %247 = vmatpush1.msra.mxu0 0.0
    %248 = vmatprep.subr.mxu0 0.0
    %249 = vmatpush1.msra.mxu0 0.0
    %250 = vmatprep.subr.mxu0 0.0
    %251 = vmatpush1.msra.mxu0 0.0
    %252 = vmatprep.subr.mxu0 0.0
    %253 = vmatpush1.msra.mxu0 0.0
    %254 = vmatprep.subr.mxu0 0.0
    %255 = vmatpush1.msra.mxu0 0.0
    %256 = vmatprep.subr.mxu0 0.0
    %257 = vmatpush1.msra.mxu0 0.0
    %258 = vmatprep.subr.mxu0 0.0
    %259 = vmatpush1.msra.mxu0 0.0
    %260 = vmatprep.subr.mxu0 0.0
    %261 = vmatpush1.msra.mxu0 0.0
    %262 = vmatprep.subr.mxu0 0.0
    %263 = vmatpush1.msra.mxu0 0.0
    %264 = vmatprep.subr.mxu0 0.0
    %265 = vmatpush1.msra.mxu0 0.0
    %266 = vmatprep.subr.mxu0 0.0
    %267 = vmatpush1.msra.mxu0 0.0
    %268 = vmatprep.subr.mxu0 0.0
    %269 = vmatpush1.msra.mxu0 0.0
    %270 = vmatprep.subr.mxu0 0.0
    %271 = vmatpush1.msra.mxu0 0.0
    %272 = vmatprep.subr.mxu0 0.0
    %273 = vmatpush1.msra.mxu0 0.0
    %274 = vmatprep.subr.mxu0 0.0
    %275 = vmatpush1.msra.mxu0 0.0
    %276 = vmatprep.subr.mxu0 0.0
    %277 = vmatpush1.msra.mxu0 0.0
    %278 = vmatprep.subr.mxu0 0.0
    %279 = vmatpush1.msra.mxu0 0.0
    %280 = vmatprep.subr.mxu0 0.0
    %281 = vmatpush1.msra.mxu0 0.0
    %282 = vmatprep.subr.mxu0 0.0
    %283 = vmatpush1.msra.mxu0 0.0
    %284 = vmatprep.subr.mxu0 0.0
    %285 = vmatpush1.msra.mxu0 0.0
    %286 = vmatprep.subr.mxu0 0.0
    %287 = vmatpush1.msra.mxu0 0.0
    %288 = vmatprep.subr.mxu0 0.0
    %289 = vmatpush1.msra.mxu0 0.0
    %290 = vmatprep.subr.mxu0 0.0
    %291 = vmatpush1.msra.mxu0 0.0
    %292 = vmatprep.subr.mxu0 0.0
    %293 = vmatpush1.msra.mxu0 0.0
    %294 = vmatprep.mubr.f32.mxu0 0.0
    %295 = vmatmul.mubr.f32.gmra.mrb[0].mxu0 %v228
    %v296 = vpop.f32.mrb[0].mxu0
    %v297 = vadd.f32 %v224, %v296
    %v298 = vpop.f32.mrb[0].mxu0
    %299 = vdwg.mxu0
    %vm300 = vcmask 64512
    %301 = vst.msk [vmem:[#allocation2] sm:$0xff] %vm300, %v297
    // Predicated region
    $region22: #{tpu_custom_call.1} parent=1 // pred_check
      _
    $region23: #{tpu_custom_call.1} parent=1 // pred_check_branch
      %303 = sbr.rel (0) target = $region25
    $region24: #{tpu_custom_call.1} parent=1 // pred_region
      %s305 = ssub.s32 128, 128
      %306 = vsyncadd [#allocation3], %s305
      %s308 = sshll.u32 [#allocation2], 4
      %s309 = int_to_ptr.vmem [resolvable:$true] %s308
      %311 = dma.vmem_to_hbm [thread:$0]  %s309, 128, %s5, [#allocation3]
    $region25: #{tpu_custom_call.1} parent=1 // pred_fallthru
      _
    // Predicated region
    $region26: #{tpu_custom_call.1} parent=1 // pred_check
      _
    $region27: #{tpu_custom_call.1} parent=1 // pred_check_branch
      %313 = sbr.rel (0) target = $region29
    $region28: #{tpu_custom_call.1} parent=1 // pred_region
      %314 = dma.done [#allocation3], 128
    $region29: #{tpu_custom_call.1} parent=1 // pred_fallthru
      _
    %315 = vsyncpa [#allocation3], 1

</llo_original>
